<compile_context>
chip_gen: v7x
topology: tpu7x:2x2x1
jax: 0.10.0
libtpu: 0.0.40
codegen_flags: <defaults>
</compile_context>

<pallas_src>
import jax
import jax.numpy as jnp
from jax import lax
from jax.experimental import pallas as pl
from jax.experimental.pallas import tpu as pltpu

EPS = 1e-5  # default eps for both nn.BatchNorm2d and nn.InstanceNorm2d

_LANE = 128
_MIB = 1024 * 1024
_FUSED_F32_BYTES_MAX = 4 * _MIB   # use the fused single-pass path below this


def _vmem_budget():
    """(vmem_limit_bytes, per-block f32-equivalent slab budget) per chip gen."""
    try:
        cap = int(pltpu.get_tpu_info().vmem_capacity_bytes)
    except Exception:
        cap = 64 * _MIB                       # conservative (v7x-sized) fallback
    limit = min(max(cap // 2, 32 * _MIB), 96 * _MIB)   # v7x: 32 MiB, v5e/v6e: 64 MiB
    block = max(2 * _MIB, limit // 8)         # pass-2 holds ~4 double-buffered slabs
    return limit, block


def _pick_tile(dim, unit, cap):
    """Largest multiple of `unit` that divides `dim` and is <= cap.

    Falls back to the full dimension when `dim` is not a multiple of `unit`
    (a full-extent block is always legal).
    """
    if dim % unit != 0 or dim <= unit:
        return dim
    best = unit
    t = unit
    limit = min(dim, max(unit, cap))
    while t <= limit:
        if dim % t == 0:
            best = t
        t += unit
    return best


# --------------------------- fused single-pass path -------------------------

def _make_fused_kernel(n, hw):
    inv_hw = 1.0 / float(hw)
    inv_nhw = 1.0 / float(n * hw)

    def kernel(x_ref, g_ref, bt_ref, m_ref, o_ref):
        x = x_ref[...].astype(jnp.float32)                     # (n, c, hw)
        s = jnp.sum(x, axis=2, keepdims=True)                  # (n, c, 1)
        q = jnp.sum(x * x, axis=2, keepdims=True)              # (n, c, 1)

        # InstanceNorm half: per-(sample, channel) biased stats over hw.
        in_mean = s * inv_hw
        in_var = jnp.maximum(q * inv_hw - in_mean * in_mean, 0.0)
        a_in = lax.rsqrt(in_var + EPS)
        b_in = -in_mean * a_in

        # BatchNorm half: per-channel biased batch stats over (n, hw), affine.
        bn_mean = jnp.sum(s, axis=0, keepdims=True) * inv_nhw          # (1, c, 1)
        bn_var = jnp.maximum(
            jnp.sum(q, axis=0, keepdims=True) * inv_nhw - bn_mean * bn_mean, 0.0)
        a_bn = g_ref[...] * lax.rsqrt(bn_var + EPS)                    # (1, c, 1)
        b_bn = bt_ref[...] - bn_mean * a_bn                            # (1, c, 1)

        # Blend per channel (m==1 -> BN, m==0 -> IN); pure elementwise, no
        # in-kernel slicing / concatenation.
        m = m_ref[...]                                                 # (1, c, 1)
        a = m * a_bn + (1.0 - m) * a_in                                # (n, c, 1)
        b = m * b_bn + (1.0 - m) * b_in                                # (n, c, 1)

        o_ref[...] = (x * a + b).astype(o_ref.dtype)

    return kernel


# --------------------------- two-pass streaming path ------------------------

def _stats_kernel(x_ref, sum_ref, sq_ref):
    """Per-row sum and sum-of-squares, accumulated across the HW grid axis."""
    @pl.when(pl.program_id(1) == 0)
    def _():
        sum_ref[...] = jnp.zeros_like(sum_ref)
        sq_ref[...] = jnp.zeros_like(sq_ref)

    x = x_ref[...].astype(jnp.float32)                   # (TR, THW)
    sum_ref[...] += jnp.sum(x, axis=1, keepdims=True)
    sq_ref[...] += jnp.sum(x * x, axis=1, keepdims=True)


def _scale_bias_kernel(x_ref, a_ref, b_ref, o_ref):
    """Fused normalize + affine: out = x * a + b (a, b broadcast per row)."""
    x = x_ref[...].astype(jnp.float32)
    o_ref[...] = (x * a_ref[...] + b_ref[...]).astype(o_ref.dtype)


# --------------------------------- wrapper ----------------------------------

def ibnorm(x_nchw, gamma, beta, *, force_two_pass=False):
    """IBNorm forward. x_nchw: (N, C, H, W). gamma/beta: (C//2,) BN affine."""
    n, c, h, w = x_nchw.shape
    bn_c = c // 2
    hw = h * w
    r = n * c

    vmem_limit, block_bytes = _vmem_budget()
    gamma32 = gamma.astype(jnp.float32)
    beta32 = beta.astype(jnp.float32)

    # ---- Fused single-pass path: whole tensor fits comfortably in VMEM ----
    if (not force_two_pass) and r * hw * 4 <= _FUSED_F32_BYTES_MAX:
        x3 = x_nchw.reshape(n, c, hw)                     # native dtype, no copy
        pad_aff = jnp.zeros((c - bn_c,), jnp.float32)
        g = jnp.concatenate([gamma32, pad_aff]).reshape(1, c, 1)
        bt = jnp.concatenate([beta32, pad_aff]).reshape(1, c, 1)
        m = (jnp.arange(c) < bn_c).astype(jnp.float32).reshape(1, c, 1)
        out3 = pl.pallas_call(
            _make_fused_kernel(n, hw),
            out_shape=jax.ShapeDtypeStruct((n, c, hw), x_nchw.dtype),
            compiler_params=pltpu.CompilerParams(
                vmem_limit_bytes=int(vmem_limit)),
        )(x3, g, bt, m)
        return out3.reshape(n, c, h, w)

    # ---- Two-pass streaming path (large tensors) ----
    x2 = x_nchw.reshape(r, hw)                            # native dtype, no copy
    hw_p = pl.cdiv(hw, _LANE) * _LANE
    if hw_p != hw:
        # Zero-pad the lane axis: zeros don't perturb sum / sumsq (divisors
        # stay hw) and keep stores lane-dense with a bounded VMEM footprint.
        x2 = jnp.pad(x2, ((0, 0), (0, hw_p - hw)))

    itemsize = jnp.dtype(x_nchw.dtype).itemsize
    sub_unit = 8 * max(1, 4 // itemsize)                  # f32:8, bf16:16, int8:32
    elems = block_bytes // 4                              # budget in f32 elems
    lane_cap = max(_LANE, (elems // sub_unit) // _LANE * _LANE)
    thw = _pick_tile(hw_p, _LANE, lane_cap)
    tr_cap = max(sub_unit, (elems // max(thw, 1)) // sub_unit * sub_unit)
    tr2 = _pick_tile(r, sub_unit, tr_cap)

    # Pass 1's only "parallel" axis is rows: make sure it has >= 2 blocks so
    # both TensorCores get work on v7x (when r allows an exact split).
    tr1 = tr2
    if r // tr1 < 2 and r >= 2 * sub_unit and r % sub_unit == 0:
        half_cap = (r // 2) // sub_unit * sub_unit
        if half_cap >= sub_unit:
            tr1 = _pick_tile(r, sub_unit, half_cap)

    grid_hw = pl.cdiv(hw_p, thw)

    # ---- Pass 1: per-row sum / sum-of-squares (one pipelined HBM read) ----
    sums, sqs = pl.pallas_call(
        _stats_kernel,
        out_shape=(jax.ShapeDtypeStruct((r, 1), jnp.float32),
                   jax.ShapeDtypeStruct((r, 1), jnp.float32)),
        grid=(pl.cdiv(r, tr1), grid_hw),
        in_specs=[pl.BlockSpec((tr1, thw), lambda i, j: (i, j))],
        out_specs=(pl.BlockSpec((tr1, 1), lambda i, j: (i, 0)),
                   pl.BlockSpec((tr1, 1), lambda i, j: (i, 0))),
        compiler_params=pltpu.CompilerParams(
            dimension_semantics=("parallel", "arbitrary"),
            vmem_limit_bytes=int(vmem_limit)),
    )(x2)

    # ---- Tiny per-channel scalar math (2*N*C floats) in plain JAX ----
    s = sums.reshape(n, c)
    q = sqs.reshape(n, c)

    bn_cnt = jnp.float32(n * hw)
    bn_mean = jnp.sum(s[:, :bn_c], axis=0) / bn_cnt
    bn_var = jnp.maximum(jnp.sum(q[:, :bn_c], axis=0) / bn_cnt
                         - bn_mean * bn_mean, 0.0)
    bn_a = gamma32 * lax.rsqrt(bn_var + EPS)
    bn_b = beta32 - bn_mean * bn_a
    a_bn = jnp.broadcast_to(bn_a[None, :], (n, bn_c))
    b_bn = jnp.broadcast_to(bn_b[None, :], (n, bn_c))

    in_cnt = jnp.float32(hw)
    in_mean = s[:, bn_c:] / in_cnt
    in_var = jnp.maximum(q[:, bn_c:] / in_cnt - in_mean * in_mean, 0.0)
    a_in = lax.rsqrt(in_var + EPS)
    b_in = -in_mean * a_in

    a = jnp.concatenate([a_bn, a_in], axis=1).reshape(r, 1)
    b = jnp.concatenate([b_bn, b_in], axis=1).reshape(r, 1)

    # ---- Pass 2: fused scale/bias FMA, output written in native dtype ----
    out2 = pl.pallas_call(
        _scale_bias_kernel,
        out_shape=jax.ShapeDtypeStruct((r, hw_p), x_nchw.dtype),
        grid=(pl.cdiv(r, tr2), grid_hw),
        in_specs=[pl.BlockSpec((tr2, thw), lambda i, j: (i, j)),
                  pl.BlockSpec((tr2, 1), lambda i, j: (i, 0)),
                  pl.BlockSpec((tr2, 1), lambda i, j: (i, 0))],
        out_specs=pl.BlockSpec((tr2, thw), lambda i, j: (i, j)),
        compiler_params=pltpu.CompilerParams(
            dimension_semantics=("parallel", "parallel"),
            vmem_limit_bytes=int(vmem_limit)),
    )(x2, a, b)

    if hw_p != hw:
        out2 = out2[:, :hw]
    return out2.reshape(n, c, h, w)


def ibnorm_reference(x, gamma, beta):
    """Pure-JAX reference matching PyTorch IBNorm.forward (training mode)."""
    c = x.shape[1]
    bn_c = c // 2
    bn_x = x[:, :bn_c]
    in_x = x[:, bn_c:]
    mu = bn_x.mean(axis=(0, 2, 3), keepdims=True)
    var = bn_x.var(axis=(0, 2, 3), keepdims=True)
    bn = (bn_x - mu) / jnp.sqrt(var + EPS)
    bn = bn * gamma.reshape(1, -1, 1, 1) + beta.reshape(1, -1, 1, 1)
    mu_i = in_x.mean(axis=(2, 3), keepdims=True)
    var_i = in_x.var(axis=(2, 3), keepdims=True)
    inn = (in_x - mu_i) / jnp.sqrt(var_i + EPS)
    return jnp.concatenate([bn, inn], axis=1)


if __name__ == "__main__":
    key = jax.random.PRNGKey(0)
    kx, kg, kb = jax.random.split(key, 3)

    N, C, H, W = 2, 4, 16, 16        # in_channels=4 -> bnorm=2, inorm=2
    x = jax.random.normal(kx, (N, C, H, W), dtype=jnp.float32) * 2.0 + 0.5
    gamma = 1.0 + 0.1 * jax.random.normal(kg, (C // 2,), dtype=jnp.float32)
    beta = 0.1 * jax.random.normal(kb, (C // 2,), dtype=jnp.float32)

    ref = ibnorm_reference(x, gamma, beta)

    # Default (fused single-pass) path.
    out_fused = jax.block_until_ready(ibnorm(x, gamma, beta))
    assert out_fused.shape == (N, C, H, W)
    assert jnp.allclose(out_fused, ref, atol=1e-4, rtol=1e-4), "fused mismatch"

    # Streaming two-pass path (used for large tensors) exercised too.
    out_2p = jax.block_until_ready(ibnorm(x, gamma, beta, force_two_pass=True))
    assert out_2p.shape == (N, C, H, W)
    assert jnp.allclose(out_2p, ref, atol=1e-4, rtol=1e-4), "two-pass mismatch"

    print("KERNEL_OK")
</pallas_src>

<mosaic_0001>
module attributes {stable_mosaic.version = 11 : i64} {
  func.func @kernel(%arg0: memref<2x4x256xf32, #tpu.memory_space<vmem>>, %arg1: memref<1x4x1xf32, #tpu.memory_space<vmem>>, %arg2: memref<1x4x1xf32, #tpu.memory_space<vmem>>, %arg3: memref<1x4x1xf32, #tpu.memory_space<vmem>>, %arg4: memref<2x4x256xf32, #tpu.memory_space<vmem>>) attributes {dimension_semantics = [], scalar_prefetch = 0 : i64, scratch_operands = 0 : i64, tpu.core_type = #tpu.core_type<tc>} {
    %c0 = arith.constant 0 : index
    %c0_0 = arith.constant 0 : index
    %c0_1 = arith.constant 0 : index
    %0 = vector.load %arg0[%c0, %c0_0, %c0_1] : memref<2x4x256xf32, #tpu.memory_space<vmem>>, vector<2x4x256xf32>
    %cst = arith.constant dense<0.000000e+00> : vector<2x4xf32>
    %1 = vector.multi_reduction <add>, %0, %cst [2] : vector<2x4x256xf32> to vector<2x4xf32>
    %2 = vector.shape_cast %1 : vector<2x4xf32> to vector<2x4x1xf32>
    %3 = arith.mulf %0, %0 : vector<2x4x256xf32>
    %cst_2 = arith.constant dense<0.000000e+00> : vector<2x4xf32>
    %4 = vector.multi_reduction <add>, %3, %cst_2 [2] : vector<2x4x256xf32> to vector<2x4xf32>
    %5 = vector.shape_cast %4 : vector<2x4xf32> to vector<2x4x1xf32>
    %cst_3 = arith.constant 3.906250e-03 : f32
    %6 = vector.broadcast %cst_3 : f32 to vector<2x4x1xf32>
    %7 = arith.mulf %2, %6 : vector<2x4x1xf32>
    %cst_4 = arith.constant 3.906250e-03 : f32
    %8 = vector.broadcast %cst_4 : f32 to vector<2x4x1xf32>
    %9 = arith.mulf %5, %8 : vector<2x4x1xf32>
    %10 = arith.mulf %7, %7 : vector<2x4x1xf32>
    %11 = arith.subf %9, %10 : vector<2x4x1xf32>
    %cst_5 = arith.constant 0.000000e+00 : f32
    %12 = vector.broadcast %cst_5 : f32 to vector<2x4x1xf32>
    %13 = arith.maximumf %11, %12 : vector<2x4x1xf32>
    %cst_6 = arith.constant 9.99999974E-6 : f32
    %14 = vector.broadcast %cst_6 : f32 to vector<2x4x1xf32>
    %15 = arith.addf %13, %14 : vector<2x4x1xf32>
    %16 = math.rsqrt %15 : vector<2x4x1xf32>
    %cst_7 = arith.constant 0.000000e+00 : f32
    %17 = vector.broadcast %cst_7 : f32 to vector<2x4x1xf32>
    %18 = arith.subf %17, %7 : vector<2x4x1xf32>
    %19 = arith.mulf %18, %16 : vector<2x4x1xf32>
    %cst_8 = arith.constant dense<0.000000e+00> : vector<4x1xf32>
    %20 = vector.multi_reduction <add>, %2, %cst_8 [0] : vector<2x4x1xf32> to vector<4x1xf32>
    %21 = vector.shape_cast %20 : vector<4x1xf32> to vector<1x4x1xf32>
    %cst_9 = arith.constant 0.001953125 : f32
    %22 = vector.broadcast %cst_9 : f32 to vector<1x4x1xf32>
    %23 = arith.mulf %21, %22 : vector<1x4x1xf32>
    %cst_10 = arith.constant dense<0.000000e+00> : vector<4x1xf32>
    %24 = vector.multi_reduction <add>, %5, %cst_10 [0] : vector<2x4x1xf32> to vector<4x1xf32>
    %25 = vector.shape_cast %24 : vector<4x1xf32> to vector<1x4x1xf32>
    %cst_11 = arith.constant 0.001953125 : f32
    %26 = vector.broadcast %cst_11 : f32 to vector<1x4x1xf32>
    %27 = arith.mulf %25, %26 : vector<1x4x1xf32>
    %28 = arith.mulf %23, %23 : vector<1x4x1xf32>
    %29 = arith.subf %27, %28 : vector<1x4x1xf32>
    %cst_12 = arith.constant 0.000000e+00 : f32
    %30 = vector.broadcast %cst_12 : f32 to vector<1x4x1xf32>
    %31 = arith.maximumf %29, %30 : vector<1x4x1xf32>
    %c0_13 = arith.constant 0 : index
    %c0_14 = arith.constant 0 : index
    %c0_15 = arith.constant 0 : index
    %32 = vector.load %arg1[%c0_13, %c0_14, %c0_15] : memref<1x4x1xf32, #tpu.memory_space<vmem>>, vector<1x4x1xf32>
    %cst_16 = arith.constant 9.99999974E-6 : f32
    %33 = vector.broadcast %cst_16 : f32 to vector<1x4x1xf32>
    %34 = arith.addf %31, %33 : vector<1x4x1xf32>
    %35 = math.rsqrt %34 : vector<1x4x1xf32>
    %36 = arith.mulf %32, %35 : vector<1x4x1xf32>
    %c0_17 = arith.constant 0 : index
    %c0_18 = arith.constant 0 : index
    %c0_19 = arith.constant 0 : index
    %37 = vector.load %arg2[%c0_17, %c0_18, %c0_19] : memref<1x4x1xf32, #tpu.memory_space<vmem>>, vector<1x4x1xf32>
    %38 = arith.mulf %23, %36 : vector<1x4x1xf32>
    %39 = arith.subf %37, %38 : vector<1x4x1xf32>
    %c0_20 = arith.constant 0 : index
    %c0_21 = arith.constant 0 : index
    %c0_22 = arith.constant 0 : index
    %40 = vector.load %arg3[%c0_20, %c0_21, %c0_22] : memref<1x4x1xf32, #tpu.memory_space<vmem>>, vector<1x4x1xf32>
    %41 = arith.mulf %40, %36 : vector<1x4x1xf32>
    %cst_23 = arith.constant 1.000000e+00 : f32
    %42 = vector.broadcast %cst_23 : f32 to vector<1x4x1xf32>
    %43 = arith.subf %42, %40 : vector<1x4x1xf32>
    %44 = vector.broadcast %43 : vector<1x4x1xf32> to vector<2x4x1xf32>
    %45 = arith.mulf %44, %16 : vector<2x4x1xf32>
    %46 = vector.broadcast %41 : vector<1x4x1xf32> to vector<2x4x1xf32>
    %47 = arith.addf %46, %45 : vector<2x4x1xf32>
    %48 = arith.mulf %40, %39 : vector<1x4x1xf32>
    %cst_24 = arith.constant 1.000000e+00 : f32
    %49 = vector.broadcast %cst_24 : f32 to vector<1x4x1xf32>
    %50 = arith.subf %49, %40 : vector<1x4x1xf32>
    %51 = vector.broadcast %50 : vector<1x4x1xf32> to vector<2x4x1xf32>
    %52 = arith.mulf %51, %19 : vector<2x4x1xf32>
    %53 = vector.broadcast %48 : vector<1x4x1xf32> to vector<2x4x1xf32>
    %54 = arith.addf %53, %52 : vector<2x4x1xf32>
    %55 = vector.broadcast %47 : vector<2x4x1xf32> to vector<2x4x256xf32>
    %56 = arith.mulf %0, %55 : vector<2x4x256xf32>
    %57 = vector.broadcast %54 : vector<2x4x1xf32> to vector<2x4x256xf32>
    %58 = arith.addf %56, %57 : vector<2x4x256xf32>
    %c0_25 = arith.constant 0 : index
    %c0_26 = arith.constant 0 : index
    %c0_27 = arith.constant 0 : index
    %59 = vector.load %arg4[%c0_25, %c0_26, %c0_27] : memref<2x4x256xf32, #tpu.memory_space<vmem>>, vector<2x4x256xf32>
    tpu.vector_store %arg4[%c0_25, %c0_26, %c0_27], %58 {strides = array<i32>} : memref<2x4x256xf32, #tpu.memory_space<vmem>>, vector<2x4x256xf32>,
    return
  }
}

</mosaic_0001>

<llo_original>
// kernel: tpu_custom_call.1
$region0: #{tpu_custom_call.1}
  #allocation0 [shape = 'u32[]', space=smem, size = 0x4, offset = 0x4, fixed_abs, tag = 'smem constant byte address 0x4 - core index']
  #allocation1 [shape = 'u32[144,128]{1,0:T(1,128)}', space=vmem, size = 0x12000, scoped, tag = 'internal scratch']
  %s0 = inlined_call_operand.hbm [shape: f32[2,4,256], index: 0, kind: input, shape index: {}]
  %s1 = inlined_call_operand.vmem [shape: f32[1,4,1], index: 1, kind: input, shape index: {}]
  %s2 = inlined_call_operand.vmem [shape: f32[1,4,1], index: 2, kind: input, shape index: {}]
  %s3 = inlined_call_operand.vmem [shape: f32[1,4,1], index: 3, kind: input, shape index: {}]
  %s4 = inlined_call_operand.hbm [shape: f32[2,4,256], index: 4, kind: output, shape index: {}]
  %s5 = sld [smem:[#allocation0]]
  $region30: #{tpu_custom_call.1} parent=0
    _
  %s7 = ssub.s32 1, %s5
  %s8 = scalar_select 0, %s7, %s5
  $region1: #{tpu_custom_call.1} parent=0
    #allocation2 [shape = 'u8[8192]{0}', space=vmem, size = 0x2000, scoped, tag = 'input window, operand 0, single buffered']
    #allocation3 [shape = 's32[1]{0}', space=sflag, size = 0x4, scoped, tag = 'scoped memory for tpu_custom_call.1']
    #allocation4 [shape = 's32[1]{0}', space=sflag, size = 0x4, scoped, tag = 'scoped memory for tpu_custom_call.1']
    #allocation5 [shape = 'u8[8192]{0}', space=vmem, size = 0x2000, scoped, tag = 'output window, operand 0, single buffered']
    %9 = vsyncpa [#allocation3], 0
    %10 = vsyncpa [#allocation4], 0
    // Predicated region
    $region2: #{tpu_custom_call.1} parent=1 // pred_check
      _
    $region3: #{tpu_custom_call.1} parent=1 // pred_check_branch
      %12 = sbr.rel (0) target = $region5
    $region4: #{tpu_custom_call.1} parent=1 // pred_region
      %s14 = ssub.s32 256, 256
      %15 = vsyncadd [#allocation3], %s14
      %s16 = sshll.u32 [#allocation2], 4
      %s17 = int_to_ptr.vmem [resolvable:$true] %s16
      %22 = dma.hbm_to_vmem [thread:$0]  %s0, 256, %s17, [#allocation3], 128, 128, 8
    $region5: #{tpu_custom_call.1} parent=1 // pred_fallthru
      _
    // Predicated region
    $region6: #{tpu_custom_call.1} parent=1 // pred_check
      _
    $region7: #{tpu_custom_call.1} parent=1 // pred_check_branch
      %24 = sbr.rel (0) target = $region9
    $region8: #{tpu_custom_call.1} parent=1 // pred_region
      _
    $region9: #{tpu_custom_call.1} parent=1 // pred_fallthru
      _
    // Predicated region
    $region10: #{tpu_custom_call.1} parent=1 // pred_check
      _
    $region11: #{tpu_custom_call.1} parent=1 // pred_check_branch
      %26 = sbr.rel (0) target = $region13
    $region12: #{tpu_custom_call.1} parent=1 // pred_region
      _
    $region13: #{tpu_custom_call.1} parent=1 // pred_fallthru
      _
    // Predicated region
    $region14: #{tpu_custom_call.1} parent=1 // pred_check
      _
    $region15: #{tpu_custom_call.1} parent=1 // pred_check_branch
      %28 = sbr.rel (0) target = $region17
    $region16: #{tpu_custom_call.1} parent=1 // pred_region
      _
    $region17: #{tpu_custom_call.1} parent=1 // pred_fallthru
      _
    // Predicated region
    $region18: #{tpu_custom_call.1} parent=1 // pred_check
      _
    $region19: #{tpu_custom_call.1} parent=1 // pred_check_branch
      %30 = sbr.rel (0) target = $region21
    $region20: #{tpu_custom_call.1} parent=1 // pred_region
      %31 = dma.done [#allocation3], 256
    $region21: #{tpu_custom_call.1} parent=1 // pred_fallthru
      _
    %v32 = vld [vmem:[#allocation2] sm:$0xff]
    %v33 = vld [vmem:[#allocation2 + $0x8] sm:$0xff]
    %v36 = vcombine.high %v32, %v32
    %v37 = vcombine.high %v33, %v33
    %vm40 = vcmask 1043456
    %v41 = vsel %vm40, %v32, 0.0
    %v42 = vsel %vm40, %v36, 0.0
    %v43 = vadd.f32 %v41, %v42
    %44 = vadd.xlane.f32.xlu0 %v43
    %v45 = vpop.xlane.xlu0 %44
    %v46 = vsel %vm40, %v33, 0.0
    %v47 = vsel %vm40, %v37, 0.0
    %v48 = vadd.f32 %v46, %v47
    %49 = vadd.xlane.f32.xlu0 %v48
    %v50 = vpop.xlane.xlu0 %49
    %v51 = vmul.f32 %v32, %v32
    %v52 = vmul.f32 %v33, %v33
    %v55 = vcombine.high %v51, %v51
    %v56 = vcombine.high %v52, %v52
    %v59 = vsel %vm40, %v51, 0.0
    %v60 = vsel %vm40, %v55, 0.0
    %v61 = vadd.f32 %v59, %v60
    %62 = vadd.xlane.f32.xlu0 %v61
    %v63 = vpop.xlane.xlu0 %62
    %v64 = vsel %vm40, %v52, 0.0
    %v65 = vsel %vm40, %v56, 0.0
    %v66 = vadd.f32 %v64, %v65
    %67 = vadd.xlane.f32.xlu0 %v66
    %v68 = vpop.xlane.xlu0 %67
    %v69 = vmul.f32 %v45, 0.00390625
    %v70 = vmul.f32 %v50, 0.00390625
    %v71 = vmul.f32 %v63, 0.00390625
    %v72 = vmul.f32 %v68, 0.00390625
    %v73 = vmul.f32 %v69, %v69
    %v74 = vmul.f32 %v70, %v70
    %v75 = vsub.f32 %v71, %v73
    %v76 = vsub.f32 %v72, %v74
    %v77 = vmax.f32 %v75, 0.0
    %v78 = vmax.f32 %v76, 0.0
    %v79 = vadd.f32 %v77, 1e-05
    %v80 = vadd.f32 %v78, 1e-05
    %v81 = vrsqrt.pop %v79
    %v82 = vrsqrt.pop %v80
    %v83 = vsub.f32 0.0, %v69
    %v84 = vsub.f32 0.0, %v70
    %v85 = vmul.f32 %v83, %v81
    %v86 = vmul.f32 %v84, %v82
    %v87 = vsel %vm40, %v45, 0.0
    %v88 = vsel %vm40, %v50, 0.0
    %v89 = vadd.f32 %v87, %v88
    %v90 = vmul.f32 %v89, 0.001953125
    %v91 = vsel %vm40, %v63, 0.0
    %v92 = vsel %vm40, %v68, 0.0
    %v93 = vadd.f32 %v91, %v92
    %v94 = vmul.f32 %v93, 0.001953125
    %v95 = vmul.f32 %v90, %v90
    %v96 = vsub.f32 %v94, %v95
    %v97 = vmax.f32 %v96, 0.0
    %v98 = vld [vmem:[%s1] sm:$0xf]
    %v99 = vadd.f32 %v97, 1e-05
    %v100 = vrsqrt.pop %v99
    %v101 = vmul.f32 %v98, %v100
    %v102 = vld [vmem:[%s2] sm:$0xf]
    %v103 = vmul.f32 %v90, %v101
    %v104 = vsub.f32 %v102, %v103
    %v105 = vld [vmem:[%s3] sm:$0xf]
    %v106 = vmul.f32 %v105, %v101
    %v107 = vsub.f32 1.0, %v105
    %v108 = vmul.f32 %v107, %v81
    %v109 = vmul.f32 %v107, %v82
    %v110 = vadd.f32 %v106, %v108
    %v111 = vadd.f32 %v106, %v109
    %v112 = vmul.f32 %v105, %v104
    %v113 = vmul.f32 %v107, %v85
    %v114 = vmul.f32 %v107, %v86
    %v115 = vadd.f32 %v112, %v113
    %v116 = vadd.f32 %v112, %v114
    %118 = vset.pattern.permute.xlu0 0
    %119 = vperm.xlu0 %118, %v110
    %v120 = vpop.permute.xlu0 %119
    %122 = vset.pattern.permute.xlu0 0
    %123 = vperm.xlu0 %122, %v111
    %v124 = vpop.permute.xlu0 %123
    %v126 = vunpack.c.l.s4 839922192
    %v127 = vunpack.c.0.s8 %v126
    %v128 = vlaneseq
    %v129 = vshrl.u32 %v128, 7
    %v130 = vsub.s32 %v127, %v129
    %v131 = vrot.slane %v120, %v130
    %v133 = vunpack.c.l.s4 839922192
    %v134 = vunpack.c.0.s8 %v133
    %v135 = vlaneseq
    %v136 = vshrl.u32 %v135, 7
    %v137 = vsub.s32 %v134, %v136
    %v138 = vrot.slane %v124, %v137
    %v141 = vmul.f32 %v32, %v131
    %v142 = vmul.f32 %v33, %v138
    %144 = vset.pattern.permute.xlu0 0
    %145 = vperm.xlu0 %144, %v115
    %v146 = vpop.permute.xlu0 %145
    %148 = vset.pattern.permute.xlu0 0
    %149 = vperm.xlu0 %148, %v116
    %v150 = vpop.permute.xlu0 %149
    %v152 = vunpack.c.l.s4 839922192
    %v153 = vunpack.c.0.s8 %v152
    %v154 = vlaneseq
    %v155 = vshrl.u32 %v154, 7
    %v156 = vsub.s32 %v153, %v155
    %v157 = vrot.slane %v146, %v156
    %v159 = vunpack.c.l.s4 839922192
    %v160 = vunpack.c.0.s8 %v159
    %v161 = vlaneseq
    %v162 = vshrl.u32 %v161, 7
    %v163 = vsub.s32 %v160, %v162
    %v164 = vrot.slane %v150, %v163
    %v167 = vadd.f32 %v141, %v157
    %v168 = vadd.f32 %v142, %v164
    %169 = vst [vmem:[#allocation5] sm:$0xff] %v167
    %170 = vst [vmem:[#allocation5 + $0x8] sm:$0xff] %v168
    // Predicated region
    $region22: #{tpu_custom_call.1} parent=1 // pred_check
      _
    $region23: #{tpu_custom_call.1} parent=1 // pred_check_branch
      %172 = sbr.rel (0) target = $region25
    $region24: #{tpu_custom_call.1} parent=1 // pred_region
      %s174 = ssub.s32 256, 256
      %175 = vsyncadd [#allocation4], %s174
      %s176 = sshll.u32 [#allocation5], 4
      %s177 = int_to_ptr.vmem [resolvable:$true] %s176
      %182 = dma.vmem_to_hbm [thread:$0]  %s177, 256, %s4, [#allocation4], 128, 128, 8
    $region25: #{tpu_custom_call.1} parent=1 // pred_fallthru
      _
    // Predicated region
    $region26: #{tpu_custom_call.1} parent=1 // pred_check
      _
    $region27: #{tpu_custom_call.1} parent=1 // pred_check_branch
      %184 = sbr.rel (0) target = $region29
    $region28: #{tpu_custom_call.1} parent=1 // pred_region
      %185 = dma.done [#allocation4], 256
    $region29: #{tpu_custom_call.1} parent=1 // pred_fallthru
      _
    %186 = vsyncpa [#allocation3], 1
    %187 = vsyncpa [#allocation4], 1

</llo_original>
